<compile_context>
chip_gen: v7x
topology: tpu7x:2x2x1
jax: 0.10.0
libtpu: 0.0.40
codegen_flags: <defaults>
</compile_context>

<pallas_src>
import functools

import numpy as np
import jax
import jax.numpy as jnp
from jax.experimental import pallas as pl
from jax.experimental.pallas import tpu as pltpu


def _round_up(a, m):
    return -(-a // m) * m


def _acrb_kernel(x_ref, wc_ref, w3_ref, mask_ref, out_ref, xp_ref, mp_ref, *, W, pad):
    """One batch-block of ACRB, channel-major / lane-dense end to end.

    x_ref   : (bt, C, H*W)          input block (NCHW, spatial flattened; lane-dense)
    wc_ref  : (Cp, 9*C)             conv1(1x3) o conv2(3x1) folded to one 3x3, weights-on-LHS
    w3_ref  : (C, 9*Cp)             3x3 conv, weights-on-LHS
    mask_ref: (2, H*W)              0/1 width-border masks (row0: w != 0, row1: w != W-1)
    out_ref : (bt, C, H*W)          output block (lane-dense, unmasked stores)
    xp_ref  : (bt, C, H*W + 2*pad)  flat zero-padded copy of x (VMEM scratch)
    mp_ref  : (bt, Cp, H*W + 2*pad) flat zero-padded mid activations (VMEM scratch)
    """
    bt, C, HW = x_ref.shape
    Cp = mp_ref.shape[1]
    HWp = xp_ref.shape[2]

    x = x_ref[...]                                                   # (bt, C, HW) f32
    m_not_first = mask_ref[0:1, :].reshape(1, 1, HW)                 # 0 at w == 0   (dw = -1)
    m_not_last = mask_ref[1:2, :].reshape(1, 1, HW)                  # 0 at w == W-1 (dw = +1)

    def stage(dst_ref, value):
        # Write `value` into the flat-padded scratch. The pads are full 128-lane aligned
        # stores (cheap, unmasked) and are rewritten every step, so this stays correct
        # under "parallel" grid semantics / megacore sharding.
        ch = dst_ref.shape[1]
        dst_ref[:, :, 0:pad] = jnp.zeros((bt, ch, pad), jnp.float32)
        dst_ref[:, :, pad + HW:HWp] = jnp.zeros((bt, ch, pad), jnp.float32)
        dst_ref[:, :, pad:pad + HW] = value

    def tap_stack(src_ref):
        # Gather the 9 conv taps as static lane-offset slices of the flat-padded scratch.
        # Height out-of-bounds reads land in the zero pad; the row-to-row wrap of the
        # +/-1 width taps is zeroed by the precomputed masks.
        taps = []
        for dh in (-1, 0, 1):
            for dw in (-1, 0, 1):
                s = dh * W + dw
                t = src_ref[:, :, pad + s:pad + s + HW]              # (bt, ch, HW)
                if dw == -1:
                    t = t * m_not_first
                elif dw == 1:
                    t = t * m_not_last
                taps.append(t)
        # sublane-aligned concat when ch % 8 == 0 (C and the padded Cp both are here)
        return jnp.concatenate(taps, axis=1)                         # (bt, 9*ch, HW)

    # ---- fused conv1 (1x3) o conv2 (3x1)  ==  one 3x3 conv, C -> Cp ----------------------
    stage(xp_ref, x)
    xs = tap_stack(xp_ref)                                           # (bt, 9*C, HW)
    wc_b = jnp.broadcast_to(wc_ref[...][None], (bt, Cp, 9 * C))
    mid = jnp.einsum("bmk,bkp->bmp", wc_b, xs,
                     preferred_element_type=jnp.float32)             # (bt, Cp, HW)

    # ---- conv3 (3x3), Cp -> C -------------------------------------------------------------
    stage(mp_ref, mid)
    ms = tap_stack(mp_ref)                                           # (bt, 9*Cp, HW)
    w3_b = jnp.broadcast_to(w3_ref[...][None], (bt, C, 9 * Cp))
    y = jnp.einsum("bok,bkp->bop", w3_b, ms,
                   preferred_element_type=jnp.float32)               # (bt, C, HW)

    # ---- ReLU + residual; lane-dense (unmasked) store --------------------------------------
    out_ref[...] = jnp.maximum(y, 0.0) + x


def _vmem_capacity_bytes():
    """Generation-aware VMEM capacity (128 MiB v5e/v6e, 64 MiB per TC on v7x)."""
    try:
        cap = getattr(pltpu.get_tpu_info(), "vmem_capacity_bytes", None)
        if cap:
            return int(cap)
    except Exception:
        pass
    return 64 << 20  # conservative fallback (v7x physical VMEM per TensorCore)


def _vmem_plan(B, C, Cp, HW, HWp, forced_bt=None):
    """Pick the batch block from PHYSICAL (lane/sublane padded) footprints.

    Prefers >= 2 grid steps so dimension_semantics=("parallel",) can shard the batch axis
    across both v7x TensorCores, then takes the largest divisor of B that fits the budget.
    """
    cap = _vmem_capacity_bytes()
    budget = cap // 3  # headroom for compiler temps / pipeline buffers

    lanes = _round_up(HW, 128)
    lanes_p = _round_up(HWp, 128)
    c_in = _round_up(C, 8)

    def phys_bytes(bt):
        io = 2 * 2 * bt * c_in * lanes * 4                             # x + out, double-buffered
        scratch = bt * (c_in + Cp) * lanes_p * 4                       # flat-padded scratches
        stacks = bt * (_round_up(9 * C, 8) + 9 * Cp) * lanes * 4       # im2col tap stacks
        temps = 4 * bt * c_in * lanes * 4                              # mid / y / masked taps
        wts = 4 * (Cp * _round_up(9 * C, 128)
                   + c_in * _round_up(9 * Cp, 128) + 8 * lanes)        # weight + mask blocks
        return io + scratch + stacks + temps + wts

    if forced_bt is not None:
        assert B % forced_bt == 0, "batch block must divide batch size"
        return forced_bt, phys_bytes(forced_bt), cap

    divisors = sorted((d for d in range(1, B + 1) if B % d == 0), reverse=True)
    for d in divisors:                       # largest block that fits AND keeps >= 2 steps
        if phys_bytes(d) <= budget and (B // d >= 2 or B == 1):
            return d, phys_bytes(d), cap
    for d in divisors:                       # fall back: largest block that fits at all
        if phys_bytes(d) <= budget:
            return d, phys_bytes(d), cap
    return 1, phys_bytes(1), cap


def acrb_forward(x_nchw, w1, w2, w3, *, batch_block=None):
    """ACRB forward.  x_nchw: (B, C, H, W) f32.

    w1: (3, C, Cm)    [kw, cin, cout]     weights of the 1x3 conv
    w2: (3, Cm, Cm)   [kh, cin, cout]     weights of the 3x1 conv
    w3: (3, 3, Cm, C) [kh, kw, cin, cout] weights of the 3x3 conv
    (weight_norm at init is identity, so w == v; a trained g/||v|| rescale would be folded
     into these weights outside the kernel.)
    """
    B, C, H, W = x_nchw.shape
    Cm = w1.shape[-1]
    HW = H * W
    Cp = _round_up(max(Cm, 1), 8)          # pad mid channels to a full sublane tile (free zeros)
    pad = _round_up(W + 1, 128)            # flat-layout halo, lane-aligned
    HWp = HW + 2 * pad

    # conv1 (width-only) followed by conv2 (height-only), both bias-free, is exactly one
    # 3x3 conv with composite weights wc[kh, kw, ci, co] = sum_m w1[kw, ci, m] * w2[kh, m, co].
    wc = jnp.einsum("wim,hmo->hwio", w1, w2)                           # (3, 3, C, Cm)
    wc_p = jnp.pad(wc, ((0, 0), (0, 0), (0, 0), (0, Cp - Cm)))         # (3, 3, C, Cp)
    w3_p = jnp.pad(w3, ((0, 0), (0, 0), (0, Cp - Cm), (0, 0)))         # (3, 3, Cp, C)

    # Weights-on-LHS 2-D forms; contraction index = (kh*3 + kw) * Cin + cin (tap-major),
    # matching the tap order and channel concat used inside the kernel.
    wc2d = jnp.transpose(wc_p, (3, 0, 1, 2)).reshape(Cp, 9 * C)        # (Cp, 9*C)
    w32d = jnp.transpose(w3_p, (3, 0, 1, 2)).reshape(C, 9 * Cp)        # (C, 9*Cp)

    # 0/1 width-border masks (kill the row-to-row wrap of the +/-1 width taps).
    wcol = np.arange(HW) % W
    masks = jnp.asarray(np.stack([(wcol != 0), (wcol != W - 1)]).astype(np.float32))  # (2, HW)

    x_flat = x_nchw.reshape(B, C, HW)                                  # metadata-only reshape

    bt, est_bytes, cap = _vmem_plan(B, C, Cp, HW, HWp, batch_block)
    vmem_limit = int(min(max(2 * est_bytes, 32 << 20), int(0.9 * cap)))

    out_flat = pl.pallas_call(
        functools.partial(_acrb_kernel, W=W, pad=pad),
        out_shape=jax.ShapeDtypeStruct((B, C, HW), jnp.float32),
        grid_spec=pltpu.PrefetchScalarGridSpec(
            num_scalar_prefetch=0,
            grid=(B // bt,),
            in_specs=[
                pl.BlockSpec((bt, C, HW), lambda i: (i, 0, 0)),
                pl.BlockSpec((Cp, 9 * C), lambda i: (0, 0)),
                pl.BlockSpec((C, 9 * Cp), lambda i: (0, 0)),
                pl.BlockSpec((2, HW), lambda i: (0, 0)),
            ],
            out_specs=pl.BlockSpec((bt, C, HW), lambda i: (i, 0, 0)),
            scratch_shapes=[
                pltpu.VMEM((bt, C, HWp), jnp.float32),
                pltpu.VMEM((bt, Cp, HWp), jnp.float32),
            ],
        ),
        compiler_params=pltpu.CompilerParams(
            dimension_semantics=("parallel",),
            vmem_limit_bytes=vmem_limit,
        ),
    )(x_flat, wc2d, w32d, masks)

    return out_flat.reshape(B, C, H, W)


def _reference(x_nchw, w1, w2, w3):
    """Pure-JAX reference using lax.conv (NHWC/HWIO), with the *unfused* weights."""
    x = jnp.transpose(x_nchw, (0, 2, 3, 1))
    conv = lambda a, w, padding: jax.lax.conv_general_dilated(
        a, w, (1, 1), padding, dimension_numbers=("NHWC", "HWIO", "NHWC"))
    y = conv(x, w1[None], ((0, 0), (1, 1)))                # (1,3,C,Cm)
    y = conv(y, w2[:, None], ((1, 1), (0, 0)))             # (3,1,Cm,Cm)
    y = conv(y, w3, ((1, 1), (1, 1)))                      # (3,3,Cm,C)
    y = jnp.maximum(y, 0.0) + x
    return jnp.transpose(y, (0, 3, 1, 2))


if __name__ == "__main__":
    # Small shapes consistent with the module: channel=8, reduction=4 -> mid channel 2.
    B, C, H, W = 2, 8, 16, 16
    R = 4
    Cm = C // R

    key = jax.random.PRNGKey(0)
    kx, k1, k2, k3 = jax.random.split(key, 4)

    x = jax.random.normal(kx, (B, C, H, W), dtype=jnp.float32)

    # Deterministic weights (weight_norm at init is identity, so w == v).
    # PyTorch Conv2d weight layout is (Cout, Cin, kh, kw); convert to kernel layouts.
    w1_t = jax.random.normal(k1, (Cm, C, 1, 3), dtype=jnp.float32) * 0.1
    w2_t = jax.random.normal(k2, (Cm, Cm, 3, 1), dtype=jnp.float32) * 0.1
    w3_t = jax.random.normal(k3, (C, Cm, 3, 3), dtype=jnp.float32) * 0.1

    w1 = jnp.transpose(w1_t[:, :, 0, :], (2, 1, 0))        # (3, C, Cm)    [kw, ci, co]
    w2 = jnp.transpose(w2_t[:, :, :, 0], (2, 1, 0))        # (3, Cm, Cm)   [kh, ci, co]
    w3 = jnp.transpose(w3_t, (2, 3, 1, 0))                 # (3, 3, Cm, C) [kh, kw, ci, co]

    out = jax.block_until_ready(acrb_forward(x, w1, w2, w3))
    ref = jax.block_until_ready(_reference(x, w1, w2, w3))

    np.testing.assert_allclose(np.asarray(out), np.asarray(ref), rtol=1e-4, atol=1e-4)
    print("KERNEL_OK")
</pallas_src>

<mosaic_0001>
module attributes {stable_mosaic.version = 11 : i64} {
  func.func @_acrb_kernel(%arg0: i32, %arg1: memref<1x8x256xf32, #tpu.memory_space<vmem>>, %arg2: memref<8x72xf32, #tpu.memory_space<vmem>>, %arg3: memref<8x72xf32, #tpu.memory_space<vmem>>, %arg4: memref<2x256xf32, #tpu.memory_space<vmem>>, %arg5: memref<1x8x256xf32, #tpu.memory_space<vmem>>, %arg6: memref<1x8x512xf32, #tpu.memory_space<vmem>>, %arg7: memref<1x8x512xf32, #tpu.memory_space<vmem>>) attributes {dimension_semantics = [#tpu.dimension_semantics<parallel>], iteration_bounds = array<i64: 2>, scalar_prefetch = 0 : i64, scratch_operands = 2 : i64, tpu.core_type = #tpu.core_type<tc>, window_params = [{transform_indices = @transform_0, window_bounds = array<i64: 1, 8, 256>}, {pipeline_mode = #tpu.pipeline_mode<synchronous>, transform_indices = @transform_1, window_bounds = array<i64: 8, 72>}, {pipeline_mode = #tpu.pipeline_mode<synchronous>, transform_indices = @transform_2, window_bounds = array<i64: 8, 72>}, {pipeline_mode = #tpu.pipeline_mode<synchronous>, transform_indices = @transform_3, window_bounds = array<i64: 2, 256>}, {transform_indices = @transform_4, window_bounds = array<i64: 1, 8, 256>}]} {
    %c0 = arith.constant 0 : index
    %c0_0 = arith.constant 0 : index
    %c0_1 = arith.constant 0 : index
    %0 = vector.load %arg1[%c0, %c0_0, %c0_1] : memref<1x8x256xf32, #tpu.memory_space<vmem>>, vector<1x8x256xf32>
    %c0_2 = arith.constant 0 : index
    %c0_3 = arith.constant 0 : index
    %1 = vector.load %arg4[%c0_2, %c0_3] : memref<2x256xf32, #tpu.memory_space<vmem>>, vector<1x256xf32>
    %2 = vector.shape_cast %1 : vector<1x256xf32> to vector<1x1x256xf32>
    %c1 = arith.constant 1 : index
    %c0_4 = arith.constant 0 : index
    %3 = vector.load %arg4[%c1, %c0_4] : memref<2x256xf32, #tpu.memory_space<vmem>>, vector<1x256xf32>
    %4 = vector.shape_cast %3 : vector<1x256xf32> to vector<1x1x256xf32>
    %cst = arith.constant 0.000000e+00 : f32
    %5 = vector.broadcast %cst : f32 to vector<1x8x128xf32>
    %c0_5 = arith.constant 0 : index
    %c0_6 = arith.constant 0 : index
    %c0_7 = arith.constant 0 : index
    %6 = vector.load %arg6[%c0_5, %c0_6, %c0_7] : memref<1x8x512xf32, #tpu.memory_space<vmem>>, vector<1x8x128xf32>
    tpu.vector_store %arg6[%c0_5, %c0_6, %c0_7], %5 {strides = array<i32>} : memref<1x8x512xf32, #tpu.memory_space<vmem>>, vector<1x8x128xf32>,
    %cst_8 = arith.constant 0.000000e+00 : f32
    %7 = vector.broadcast %cst_8 : f32 to vector<1x8x128xf32>
    %c0_9 = arith.constant 0 : index
    %c0_10 = arith.constant 0 : index
    %c384 = arith.constant 384 : index
    %8 = vector.load %arg6[%c0_9, %c0_10, %c384] : memref<1x8x512xf32, #tpu.memory_space<vmem>>, vector<1x8x128xf32>
    tpu.vector_store %arg6[%c0_9, %c0_10, %c384], %7 {strides = array<i32>} : memref<1x8x512xf32, #tpu.memory_space<vmem>>, vector<1x8x128xf32>,
    %c0_11 = arith.constant 0 : index
    %c0_12 = arith.constant 0 : index
    %c128 = arith.constant 128 : index
    %9 = vector.load %arg6[%c0_11, %c0_12, %c128] : memref<1x8x512xf32, #tpu.memory_space<vmem>>, vector<1x8x256xf32>
    tpu.vector_store %arg6[%c0_11, %c0_12, %c128], %0 {strides = array<i32>} : memref<1x8x512xf32, #tpu.memory_space<vmem>>, vector<1x8x256xf32>,
    %c0_13 = arith.constant 0 : index
    %c0_14 = arith.constant 0 : index
    %c111 = arith.constant 111 : index
    %10 = vector.load %arg6[%c0_13, %c0_14, %c111] : memref<1x8x512xf32, #tpu.memory_space<vmem>>, vector<1x8x256xf32>
    %11 = vector.broadcast %2 : vector<1x1x256xf32> to vector<1x8x256xf32>
    %12 = arith.mulf %10, %11 : vector<1x8x256xf32>
    %c0_15 = arith.constant 0 : index
    %c0_16 = arith.constant 0 : index
    %c112 = arith.constant 112 : index
    %13 = vector.load %arg6[%c0_15, %c0_16, %c112] : memref<1x8x512xf32, #tpu.memory_space<vmem>>, vector<1x8x256xf32>
    %c0_17 = arith.constant 0 : index
    %c0_18 = arith.constant 0 : index
    %c113 = arith.constant 113 : index
    %14 = vector.load %arg6[%c0_17, %c0_18, %c113] : memref<1x8x512xf32, #tpu.memory_space<vmem>>, vector<1x8x256xf32>
    %15 = vector.broadcast %4 : vector<1x1x256xf32> to vector<1x8x256xf32>
    %16 = arith.mulf %14, %15 : vector<1x8x256xf32>
    %c0_19 = arith.constant 0 : index
    %c0_20 = arith.constant 0 : index
    %c127 = arith.constant 127 : index
    %17 = vector.load %arg6[%c0_19, %c0_20, %c127] : memref<1x8x512xf32, #tpu.memory_space<vmem>>, vector<1x8x256xf32>
    %18 = vector.broadcast %2 : vector<1x1x256xf32> to vector<1x8x256xf32>
    %19 = arith.mulf %17, %18 : vector<1x8x256xf32>
    %c0_21 = arith.constant 0 : index
    %c0_22 = arith.constant 0 : index
    %c128_23 = arith.constant 128 : index
    %20 = vector.load %arg6[%c0_21, %c0_22, %c128_23] : memref<1x8x512xf32, #tpu.memory_space<vmem>>, vector<1x8x256xf32>
    %c0_24 = arith.constant 0 : index
    %c0_25 = arith.constant 0 : index
    %c129 = arith.constant 129 : index
    %21 = vector.load %arg6[%c0_24, %c0_25, %c129] : memref<1x8x512xf32, #tpu.memory_space<vmem>>, vector<1x8x256xf32>
    %22 = vector.broadcast %4 : vector<1x1x256xf32> to vector<1x8x256xf32>
    %23 = arith.mulf %21, %22 : vector<1x8x256xf32>
    %c0_26 = arith.constant 0 : index
    %c0_27 = arith.constant 0 : index
    %c143 = arith.constant 143 : index
    %24 = vector.load %arg6[%c0_26, %c0_27, %c143] : memref<1x8x512xf32, #tpu.memory_space<vmem>>, vector<1x8x256xf32>
    %25 = vector.broadcast %2 : vector<1x1x256xf32> to vector<1x8x256xf32>
    %26 = arith.mulf %24, %25 : vector<1x8x256xf32>
    %c0_28 = arith.constant 0 : index
    %c0_29 = arith.constant 0 : index
    %c144 = arith.constant 144 : index
    %27 = vector.load %arg6[%c0_28, %c0_29, %c144] : memref<1x8x512xf32, #tpu.memory_space<vmem>>, vector<1x8x256xf32>
    %c0_30 = arith.constant 0 : index
    %c0_31 = arith.constant 0 : index
    %c145 = arith.constant 145 : index
    %28 = vector.load %arg6[%c0_30, %c0_31, %c145] : memref<1x8x512xf32, #tpu.memory_space<vmem>>, vector<1x8x256xf32>
    %29 = vector.broadcast %4 : vector<1x1x256xf32> to vector<1x8x256xf32>
    %30 = arith.mulf %28, %29 : vector<1x8x256xf32>
    %31 = tpu.concatenate %12, %13, %16, %19, %20, %23, %26, %27, %30 in 1 : vector<1x8x256xf32>, vector<1x8x256xf32>, vector<1x8x256xf32>, vector<1x8x256xf32>, vector<1x8x256xf32>, vector<1x8x256xf32>, vector<1x8x256xf32>, vector<1x8x256xf32>, vector<1x8x256xf32> -> vector<1x72x256xf32>
    %c0_32 = arith.constant 0 : index
    %c0_33 = arith.constant 0 : index
    %32 = vector.load %arg2[%c0_32, %c0_33] : memref<8x72xf32, #tpu.memory_space<vmem>>, vector<8x72xf32>
    %33 = vector.shape_cast %32 : vector<8x72xf32> to vector<1x8x72xf32>
    "tpu.trace_start"() <{level = 10 : i32, message = "bmk,bkp->bmp"}> : () -> ()
    %cst_34 = arith.constant dense<0.000000e+00> : vector<1x8x256xf32>
    %34 = tpu.matmul %33, %31, %cst_34 {dimension_numbers = #tpu.dot_dimension_numbers<[2], [1], [1], [2], [0, 0, 0, 1, 1, 2], [0], [0]>} : vector<1x8x72xf32>, vector<1x72x256xf32>, vector<1x8x256xf32> -> vector<1x8x256xf32>
    %cst_35 = arith.constant 0.000000e+00 : f32
    "tpu.trace_stop"() : () -> ()
    %35 = vector.broadcast %cst_35 : f32 to vector<1x8x128xf32>
    %c0_36 = arith.constant 0 : index
    %c0_37 = arith.constant 0 : index
    %c0_38 = arith.constant 0 : index
    %36 = vector.load %arg7[%c0_36, %c0_37, %c0_38] : memref<1x8x512xf32, #tpu.memory_space<vmem>>, vector<1x8x128xf32>
    tpu.vector_store %arg7[%c0_36, %c0_37, %c0_38], %35 {strides = array<i32>} : memref<1x8x512xf32, #tpu.memory_space<vmem>>, vector<1x8x128xf32>,
    %cst_39 = arith.constant 0.000000e+00 : f32
    %37 = vector.broadcast %cst_39 : f32 to vector<1x8x128xf32>
    %c0_40 = arith.constant 0 : index
    %c0_41 = arith.constant 0 : index
    %c384_42 = arith.constant 384 : index
    %38 = vector.load %arg7[%c0_40, %c0_41, %c384_42] : memref<1x8x512xf32, #tpu.memory_space<vmem>>, vector<1x8x128xf32>
    tpu.vector_store %arg7[%c0_40, %c0_41, %c384_42], %37 {strides = array<i32>} : memref<1x8x512xf32, #tpu.memory_space<vmem>>, vector<1x8x128xf32>,
    %c0_43 = arith.constant 0 : index
    %c0_44 = arith.constant 0 : index
    %c128_45 = arith.constant 128 : index
    %39 = vector.load %arg7[%c0_43, %c0_44, %c128_45] : memref<1x8x512xf32, #tpu.memory_space<vmem>>, vector<1x8x256xf32>
    tpu.vector_store %arg7[%c0_43, %c0_44, %c128_45], %34 {strides = array<i32>} : memref<1x8x512xf32, #tpu.memory_space<vmem>>, vector<1x8x256xf32>,
    %c0_46 = arith.constant 0 : index
    %c0_47 = arith.constant 0 : index
    %c111_48 = arith.constant 111 : index
    %40 = vector.load %arg7[%c0_46, %c0_47, %c111_48] : memref<1x8x512xf32, #tpu.memory_space<vmem>>, vector<1x8x256xf32>
    %41 = vector.broadcast %2 : vector<1x1x256xf32> to vector<1x8x256xf32>
    %42 = arith.mulf %40, %41 : vector<1x8x256xf32>
    %c0_49 = arith.constant 0 : index
    %c0_50 = arith.constant 0 : index
    %c112_51 = arith.constant 112 : index
    %43 = vector.load %arg7[%c0_49, %c0_50, %c112_51] : memref<1x8x512xf32, #tpu.memory_space<vmem>>, vector<1x8x256xf32>
    %c0_52 = arith.constant 0 : index
    %c0_53 = arith.constant 0 : index
    %c113_54 = arith.constant 113 : index
    %44 = vector.load %arg7[%c0_52, %c0_53, %c113_54] : memref<1x8x512xf32, #tpu.memory_space<vmem>>, vector<1x8x256xf32>
    %45 = vector.broadcast %4 : vector<1x1x256xf32> to vector<1x8x256xf32>
    %46 = arith.mulf %44, %45 : vector<1x8x256xf32>
    %c0_55 = arith.constant 0 : index
    %c0_56 = arith.constant 0 : index
    %c127_57 = arith.constant 127 : index
    %47 = vector.load %arg7[%c0_55, %c0_56, %c127_57] : memref<1x8x512xf32, #tpu.memory_space<vmem>>, vector<1x8x256xf32>
    %48 = vector.broadcast %2 : vector<1x1x256xf32> to vector<1x8x256xf32>
    %49 = arith.mulf %47, %48 : vector<1x8x256xf32>
    %c0_58 = arith.constant 0 : index
    %c0_59 = arith.constant 0 : index
    %c128_60 = arith.constant 128 : index
    %50 = vector.load %arg7[%c0_58, %c0_59, %c128_60] : memref<1x8x512xf32, #tpu.memory_space<vmem>>, vector<1x8x256xf32>
    %c0_61 = arith.constant 0 : index
    %c0_62 = arith.constant 0 : index
    %c129_63 = arith.constant 129 : index
    %51 = vector.load %arg7[%c0_61, %c0_62, %c129_63] : memref<1x8x512xf32, #tpu.memory_space<vmem>>, vector<1x8x256xf32>
    %52 = vector.broadcast %4 : vector<1x1x256xf32> to vector<1x8x256xf32>
    %53 = arith.mulf %51, %52 : vector<1x8x256xf32>
    %c0_64 = arith.constant 0 : index
    %c0_65 = arith.constant 0 : index
    %c143_66 = arith.constant 143 : index
    %54 = vector.load %arg7[%c0_64, %c0_65, %c143_66] : memref<1x8x512xf32, #tpu.memory_space<vmem>>, vector<1x8x256xf32>
    %55 = vector.broadcast %2 : vector<1x1x256xf32> to vector<1x8x256xf32>
    %56 = arith.mulf %54, %55 : vector<1x8x256xf32>
    %c0_67 = arith.constant 0 : index
    %c0_68 = arith.constant 0 : index
    %c144_69 = arith.constant 144 : index
    %57 = vector.load %arg7[%c0_67, %c0_68, %c144_69] : memref<1x8x512xf32, #tpu.memory_space<vmem>>, vector<1x8x256xf32>
    %c0_70 = arith.constant 0 : index
    %c0_71 = arith.constant 0 : index
    %c145_72 = arith.constant 145 : index
    %58 = vector.load %arg7[%c0_70, %c0_71, %c145_72] : memref<1x8x512xf32, #tpu.memory_space<vmem>>, vector<1x8x256xf32>
    %59 = vector.broadcast %4 : vector<1x1x256xf32> to vector<1x8x256xf32>
    %60 = arith.mulf %58, %59 : vector<1x8x256xf32>
    %61 = tpu.concatenate %42, %43, %46, %49, %50, %53, %56, %57, %60 in 1 : vector<1x8x256xf32>, vector<1x8x256xf32>, vector<1x8x256xf32>, vector<1x8x256xf32>, vector<1x8x256xf32>, vector<1x8x256xf32>, vector<1x8x256xf32>, vector<1x8x256xf32>, vector<1x8x256xf32> -> vector<1x72x256xf32>
    %c0_73 = arith.constant 0 : index
    %c0_74 = arith.constant 0 : index
    %62 = vector.load %arg3[%c0_73, %c0_74] : memref<8x72xf32, #tpu.memory_space<vmem>>, vector<8x72xf32>
    %63 = vector.shape_cast %62 : vector<8x72xf32> to vector<1x8x72xf32>
    "tpu.trace_start"() <{level = 10 : i32, message = "bok,bkp->bop"}> : () -> ()
    %cst_75 = arith.constant dense<0.000000e+00> : vector<1x8x256xf32>
    %64 = tpu.matmul %63, %61, %cst_75 {dimension_numbers = #tpu.dot_dimension_numbers<[2], [1], [1], [2], [0, 0, 0, 1, 1, 2], [0], [0]>} : vector<1x8x72xf32>, vector<1x72x256xf32>, vector<1x8x256xf32> -> vector<1x8x256xf32>
    "tpu.trace_stop"() : () -> ()
    %cst_76 = arith.constant 0.000000e+00 : f32
    %65 = vector.broadcast %cst_76 : f32 to vector<1x8x256xf32>
    %66 = arith.maximumf %64, %65 : vector<1x8x256xf32>
    %67 = arith.addf %66, %0 : vector<1x8x256xf32>
    %c0_77 = arith.constant 0 : index
    %c0_78 = arith.constant 0 : index
    %c0_79 = arith.constant 0 : index
    %68 = vector.load %arg5[%c0_77, %c0_78, %c0_79] : memref<1x8x256xf32, #tpu.memory_space<vmem>>, vector<1x8x256xf32>
    tpu.vector_store %arg5[%c0_77, %c0_78, %c0_79], %67 {strides = array<i32>} : memref<1x8x256xf32, #tpu.memory_space<vmem>>, vector<1x8x256xf32>,
    return
  }
  func.func @transform_0(%arg0: i32) -> (i32, i32, i32) {
    %c0_i32 = arith.constant 0 : i32
    %c0_i32_0 = arith.constant 0 : i32
    %c0_i32_1 = arith.constant 0 : i32
    return %arg0, %c0_i32, %c0_i32_0 : i32, i32, i32
  }
  func.func @transform_1(%arg0: i32) -> (i32, i32) {
    %c0_i32 = arith.constant 0 : i32
    %c0_i32_0 = arith.constant 0 : i32
    %c0_i32_1 = arith.constant 0 : i32
    return %c0_i32, %c0_i32_0 : i32, i32
  }
  func.func @transform_2(%arg0: i32) -> (i32, i32) {
    %c0_i32 = arith.constant 0 : i32
    %c0_i32_0 = arith.constant 0 : i32
    %c0_i32_1 = arith.constant 0 : i32
    return %c0_i32, %c0_i32_0 : i32, i32
  }
  func.func @transform_3(%arg0: i32) -> (i32, i32) {
    %c0_i32 = arith.constant 0 : i32
    %c0_i32_0 = arith.constant 0 : i32
    %c0_i32_1 = arith.constant 0 : i32
    return %c0_i32, %c0_i32_0 : i32, i32
  }
  func.func @transform_4(%arg0: i32) -> (i32, i32, i32) {
    %c0_i32 = arith.constant 0 : i32
    %c0_i32_0 = arith.constant 0 : i32
    %c0_i32_1 = arith.constant 0 : i32
    return %arg0, %c0_i32, %c0_i32_0 : i32, i32, i32
  }
}

</mosaic_0001>

<llo_original>
// kernel: tpu_custom_call.1
$region0: #{tpu_custom_call.1}
  #allocation0 [shape = 'u32[]', space=smem, size = 0x4, offset = 0x4, fixed_abs, tag = 'smem constant byte address 0x4 - core index']
  #allocation1 [shape = 'u32[144,128]{1,0:T(1,128)}', space=vmem, size = 0x12000, scoped, tag = 'internal scratch']
  #allocation2 [shape = 'f32[1,8,512]{2,1,0:T(8,128)}', space=vmem, size = 0x4000, scoped, tag = 'scratch operand']
  #allocation3 [shape = 'f32[1,8,512]{2,1,0:T(8,128)}', space=vmem, size = 0x4000, scoped, tag = 'scratch operand']
  %s0 = inlined_call_operand.hbm [shape: f32[2,8,256], index: 0, kind: input, shape index: {}]
  %s1 = inlined_call_operand.hbm [shape: f32[8,72], index: 1, kind: input, shape index: {}]
  %s2 = inlined_call_operand.hbm [shape: f32[8,72], index: 2, kind: input, shape index: {}]
  %s3 = inlined_call_operand.vmem [shape: f32[2,256], index: 3, kind: input, shape index: {}]
  %s4 = inlined_call_operand.hbm [shape: f32[2,8,256], index: 4, kind: output, shape index: {}]
  %s5 = sld [smem:[#allocation0]]
  $region61: #{tpu_custom_call.1} parent=0
    _
  %s7 = ssub.s32 1, %s5
  %s8 = scalar_select 0, %s7, %s5
  $region1: #{tpu_custom_call.1} parent=0
    #allocation4 [shape = 'u8[16384]{0}', space=vmem, size = 0x4000, scoped, tag = 'input window, operand 0']
    #allocation5 [shape = 's32[2]{0}', space=sflag, size = 0x8, scoped, tag = 'scoped memory for tpu_custom_call.1']
    #allocation6 [shape = 's32[2]{0}', space=sflag, size = 0x8, scoped, tag = 'scoped memory for tpu_custom_call.1']
    #allocation7 [shape = 'u8[4096]{0}', space=vmem, size = 0x1000, scoped, tag = 'input window, operand 1, single buffered']
    #allocation8 [shape = 's32[1]{0}', space=sflag, size = 0x4, scoped, tag = 'scoped memory for tpu_custom_call.1']
    #allocation9 [shape = 'u8[4096]{0}', space=vmem, size = 0x1000, scoped, tag = 'input window, operand 2, single buffered']
    #allocation10 [shape = 'u8[16384]{0}', space=vmem, size = 0x4000, scoped, tag = 'output window, operand 0']
    %9 = vsyncpa [#allocation5], 0
    %s10 = scalar_lea.sflag [#allocation5], 1
    %11 = vsyncpa %s10, 0
    %12 = vsyncpa [#allocation8], 0
    %13 = vsyncpa [#allocation6], 0
    %s14 = scalar_lea.sflag [#allocation6], 1
    %15 = vsyncpa %s14, 0
    loop: start=0, step=1, limit=4
    $region2: #{tpu_custom_call.1} parent=1 // loop_pre_header
      _
    $region3: #{tpu_custom_call.1} parent=1 // loop_header
      %s17 = sphi 0, %s21
      %p18 = scmp.ge.s32.totalorder %s17, 4
      %s27 = sphi 0, %s29
      %s30 = sphi 0, %s27
      %s31 = sphi 0, %s30
      %s47 = sphi 0, %s31
      %s51 = sphi 0, %s51
      %s53 = sphi 0, %s51
      %s54 = sphi 0, %s53
      %s68 = sphi 0, %s54
      %s72 = sphi 0, %s72
      %s74 = sphi 0, %s72
      %s75 = sphi 0, %s74
      %s89 = sphi 0, %s75
      %s93 = sphi 0, %s93
      %s95 = sphi 0, %s93
      %s96 = sphi 0, %s95
      %s110 = sphi 0, %s96
      %s116 = sphi 0, %s118
      %s119 = sphi 0, %s116
      %s120 = sphi 0, %s119
      %s136 = sphi 0, %s120
    $region4: #{tpu_custom_call.1} parent=1 // loop_header_branch
      %20 = sbr.rel (%p18) target = $region8
    $region5: #{tpu_custom_call.1} parent=1 // loop_body
      %s22 = ssub.s32 %s17, 1
      %s23 = ssub.s32 %s17, 2
      %s24 = sadd.s32 %s17, 1
      %s25 = ssub.s32 %s17, %s24
      %p26 = scmp.eq.s32.totalorder %s25, 0
      %s28 = sadd.s32 %s27, 1
      %s29 = scalar_select %p26, %s27, %s28
      %p32 = pneg %p26
      %p33 = scmp.eq.s32.totalorder %s17, 1
      %p34 = por %p32, %p33
      %p35 = scmp.ne.s32.totalorder %s27, %s30
      %p36 = scmp.eq.s32.totalorder %s17, 0
      %p37 = por %p35, %p36
      %p38 = scmp.ne.s32.totalorder %s27, %s30
      %p39 = scmp.eq.s32.totalorder %s22, 1
      %p40 = por %p38, %p39
      %p41 = scmp.ne.s32.totalorder %s30, %s31
      %p42 = scmp.eq.s32.totalorder %s22, 0
      %p43 = por %p41, %p42
      %p44 = scmp.ne.s32.totalorder %s30, %s31
      %p45 = scmp.eq.s32.totalorder %s23, 1
      %p46 = por %p44, %p45
      %p48 = scmp.ne.s32.totalorder %s31, %s47
      %p49 = scmp.eq.s32.totalorder %s23, 0
      %p50 = por %p48, %p49
      %s52 = sadd.s32 %s51, 1
      %p55 = scmp.eq.s32.totalorder %s17, 1
      %p56 = scmp.ne.s32.totalorder %s51, %s53
      %p57 = scmp.eq.s32.totalorder %s17, 0
      %p58 = por %p56, %p57
      %p59 = scmp.ne.s32.totalorder %s51, %s53
      %p60 = scmp.eq.s32.totalorder %s22, 1
      %p61 = por %p59, %p60
      %p62 = scmp.ne.s32.totalorder %s53, %s54
      %p63 = scmp.eq.s32.totalorder %s22, 0
      %p64 = por %p62, %p63
      %p65 = scmp.ne.s32.totalorder %s53, %s54
      %p66 = scmp.eq.s32.totalorder %s23, 1
      %p67 = por %p65, %p66
      %p69 = scmp.ne.s32.totalorder %s54, %s68
      %p70 = scmp.eq.s32.totalorder %s23, 0
      %p71 = por %p69, %p70
      %s73 = sadd.s32 %s72, 1
      %p76 = scmp.eq.s32.totalorder %s17, 1
      %p77 = scmp.ne.s32.totalorder %s72, %s74
      %p78 = scmp.eq.s32.totalorder %s17, 0
      %p79 = por %p77, %p78
      %p80 = scmp.ne.s32.totalorder %s72, %s74
      %p81 = scmp.eq.s32.totalorder %s22, 1
      %p82 = por %p80, %p81
      %p83 = scmp.ne.s32.totalorder %s74, %s75
      %p84 = scmp.eq.s32.totalorder %s22, 0
      %p85 = por %p83, %p84
      %p86 = scmp.ne.s32.totalorder %s74, %s75
      %p87 = scmp.eq.s32.totalorder %s23, 1
      %p88 = por %p86, %p87
      %p90 = scmp.ne.s32.totalorder %s75, %s89
      %p91 = scmp.eq.s32.totalorder %s23, 0
      %p92 = por %p90, %p91
      %s94 = sadd.s32 %s93, 1
      %p97 = scmp.eq.s32.totalorder %s17, 1
      %p98 = scmp.ne.s32.totalorder %s93, %s95
      %p99 = scmp.eq.s32.totalorder %s17, 0
      %p100 = por %p98, %p99
      %p101 = scmp.ne.s32.totalorder %s93, %s95
      %p102 = scmp.eq.s32.totalorder %s22, 1
      %p103 = por %p101, %p102
      %p104 = scmp.ne.s32.totalorder %s95, %s96
      %p105 = scmp.eq.s32.totalorder %s22, 0
      %p106 = por %p104, %p105
      %p107 = scmp.ne.s32.totalorder %s95, %s96
      %p108 = scmp.eq.s32.totalorder %s23, 1
      %p109 = por %p107, %p108
      %p111 = scmp.ne.s32.totalorder %s96, %s110
      %p112 = scmp.eq.s32.totalorder %s23, 0
      %p113 = por %p111, %p112
      %s114 = ssub.s32 %s17, %s24
      %p115 = scmp.eq.s32.totalorder %s114, 0
      %s117 = sadd.s32 %s116, 1
      %s118 = scalar_select %p115, %s116, %s117
      %p121 = pneg %p115
      %p122 = scmp.eq.s32.totalorder %s17, 1
      %p123 = por %p121, %p122
      %p124 = scmp.ne.s32.totalorder %s116, %s119
      %p125 = scmp.eq.s32.totalorder %s17, 0
      %p126 = por %p124, %p125
      %p127 = scmp.ne.s32.totalorder %s116, %s119
      %p128 = scmp.eq.s32.totalorder %s22, 1
      %p129 = por %p127, %p128
      %p130 = scmp.ne.s32.totalorder %s119, %s120
      %p131 = scmp.eq.s32.totalorder %s22, 0
      %p132 = por %p130, %p131
      %p133 = scmp.ne.s32.totalorder %s119, %s120
      %p134 = scmp.eq.s32.totalorder %s23, 1
      %p135 = por %p133, %p134
      %p137 = scmp.ne.s32.totalorder %s120, %s136
      %p138 = scmp.eq.s32.totalorder %s23, 0
      %p139 = por %p137, %p138
      %p140 = scmp.le.s32.totalorder 1, %s17
      %p141 = scmp.lt.s32.totalorder %s17, 3
      %p142 = pnand %p140, %p141
      %p143 = pneg %p142
      // Predicated region
      $region9: #{tpu_custom_call.1} parent=5 // pred_check
        _
      $region10: #{tpu_custom_call.1} parent=5 // pred_check_branch
        %145 = sbr.rel (%p142) target = $region12
      $region11: #{tpu_custom_call.1} parent=5 // pred_region
        %s146 = ssub.s32 %s17, 1
        // Predicated region
        $region13: #{tpu_custom_call.1} parent=11 // pred_check
          %p147 = pneg %p64
        $region14: #{tpu_custom_call.1} parent=11 // pred_check_branch
          %149 = sbr.rel (%p147) target = $region16
        $region15: #{tpu_custom_call.1} parent=11 // pred_region
          %s151 = ssub.s32 128, 128
          %152 = vsyncadd [#allocation8], %s151
          %s154 = sshll.u32 [#allocation7], 4
          %s155 = int_to_ptr.vmem [resolvable:$true] %s154
          %157 = dma.hbm_to_vmem [thread:$0]  %s1, 128, %s155, [#allocation8]
        $region16: #{tpu_custom_call.1} parent=11 // pred_fallthru
          _
        // Predicated region
        $region17: #{tpu_custom_call.1} parent=11 // pred_check
          %p158 = pneg %p85
        $region18: #{tpu_custom_call.1} parent=11 // pred_check_branch
          %160 = sbr.rel (%p158) target = $region20
        $region19: #{tpu_custom_call.1} parent=11 // pred_region
          %s162 = ssub.s32 128, 128
          %163 = vsyncadd [#allocation8], %s162
          %s165 = sshll.u32 [#allocation9], 4
          %s166 = int_to_ptr.vmem [resolvable:$true] %s165
          %168 = dma.hbm_to_vmem [thread:$0]  %s2, 128, %s166, [#allocation8]
        $region20: #{tpu_custom_call.1} parent=11 // pred_fallthru
          _
        // Predicated region
        $region21: #{tpu_custom_call.1} parent=11 // pred_check
          %p169 = pneg %p106
        $region22: #{tpu_custom_call.1} parent=11 // pred_check_branch
          %171 = sbr.rel (%p169) target = $region24
        $region23: #{tpu_custom_call.1} parent=11 // pred_region
          _
        $region24: #{tpu_custom_call.1} parent=11 // pred_fallthru
          _
      $region12: #{tpu_custom_call.1} parent=5 // pred_fallthru
        _
      %p172 = scmp.lt.s32.totalorder %s17, 2
      // Predicated region
      $region25: #{tpu_custom_call.1} parent=5 // pred_check
        %p173 = pneg %p172
      $region26: #{tpu_custom_call.1} parent=5 // pred_check_branch
        %175 = sbr.rel (%p173) target = $region28
      $region27: #{tpu_custom_call.1} parent=5 // pred_region
        // Predicated region
        $region29: #{tpu_custom_call.1} parent=27 // pred_check
          %p176 = pneg %p37
        $region30: #{tpu_custom_call.1} parent=27 // pred_check_branch
          %178 = sbr.rel (%p176) target = $region32
        $region31: #{tpu_custom_call.1} parent=27 // pred_region
          %s179 = sand.u32 %s27, 1
          %s180 = scalar_lea.sflag [#allocation5], %s179
          %s181 = sand.u32 %s27, 1
          %s182 = smul.addr %s181, 16
          %s183 = scalar_lea.vmem [#allocation4], %s182
          %s185 = ssub.s32 256, 256
          %186 = vsyncadd %s180, %s185
          %s187 = smul.addr %s17, 2
          %s188 = smul.addr %s187, 128
          %s189 = scalar_lea.hbm %s0, %s188
          %s191 = sshll.u32 %s183, 4
          %s192 = int_to_ptr.vmem [resolvable:$true] %s191
          %194 = dma.hbm_to_vmem [thread:$0]  %s189, 256, %s192, %s180
        $region32: #{tpu_custom_call.1} parent=27 // pred_fallthru
          _
      $region28: #{tpu_custom_call.1} parent=5 // pred_fallthru
        _
      %p195 = scmp.le.s32.totalorder 1, %s17
      %p196 = scmp.lt.s32.totalorder %s17, 3
      %p197 = pnand %p195, %p196
      %p198 = pneg %p197
      // Predicated region
      $region33: #{tpu_custom_call.1} parent=5 // pred_check
        _
      $region34: #{tpu_custom_call.1} parent=5 // pred_check_branch
        %200 = sbr.rel (%p197) target = $region36
      $region35: #{tpu_custom_call.1} parent=5 // pred_region
        %s201 = ssub.s32 %s17, 1
        %s202 = sand.u32 %s30, 1
        %s203 = scalar_lea.sflag [#allocation5], %s202
        %s204 = sand.u32 %s30, 1
        %s205 = smul.addr %s204, 16
        %s206 = scalar_lea.vmem [#allocation4], %s205
        // Predicated region
        $region37: #{tpu_custom_call.1} parent=35 // pred_check
          %p207 = pneg %p43
        $region38: #{tpu_custom_call.1} parent=35 // pred_check_branch
          %209 = sbr.rel (%p207) target = $region40
        $region39: #{tpu_custom_call.1} parent=35 // pred_region
          %210 = dma.done %s203, 256
        $region40: #{tpu_custom_call.1} parent=35 // pred_fallthru
          _
        // Predicated region
        $region41: #{tpu_custom_call.1} parent=35 // pred_check
          %p211 = pneg %p64
        $region42: #{tpu_custom_call.1} parent=35 // pred_check_branch
          %213 = sbr.rel (%p211) target = $region44
        $region43: #{tpu_custom_call.1} parent=35 // pred_region
          %214 = dma.done [#allocation8], 128
        $region44: #{tpu_custom_call.1} parent=35 // pred_fallthru
          _
        // Predicated region
        $region45: #{tpu_custom_call.1} parent=35 // pred_check
          %p215 = pneg %p85
        $region46: #{tpu_custom_call.1} parent=35 // pred_check_branch
          %217 = sbr.rel (%p215) target = $region48
        $region47: #{tpu_custom_call.1} parent=35 // pred_region
          %218 = dma.done [#allocation8], 128
        $region48: #{tpu_custom_call.1} parent=35 // pred_fallthru
          _
        %s219 = sand.u32 %s30, 1
        %s220 = scalar_lea.sflag [#allocation5], %s219
        %s221 = sand.u32 %s30, 1
        %s222 = smul.addr %s221, 16
        %s223 = scalar_lea.vmem [#allocation4], %s222
        %p224 = pneg %p43
        %p225 = pneg %p40
        %p226 = pneg %p64
        %p227 = pneg %p61
        %p228 = pneg %p85
        %p229 = pneg %p82
        %p230 = pneg %p106
        %p231 = pneg %p103
        %p232 = pneg %p132
        %p233 = pneg %p129
        %s234 = sand.u32 %s119, 1
        %s235 = scalar_lea.sflag [#allocation6], %s234
        %s236 = sand.u32 %s119, 1
        %s237 = smul.addr %s236, 16
        %s238 = scalar_lea.vmem [#allocation10], %s237
        %v239 = vld [vmem:[%s206] sm:$0xff]
        %v240 = vld [vmem:[%s206 + $0x8] sm:$0xff]
        %v241 = vld [vmem:[%s3] ss:$2 sm:$0x3]
        %s242 = scalar_lea.vmem %s3, 1
        %v243 = vld [vmem:[%s242] ss:$2 sm:$0x3]
        %244 = vst [vmem:[#allocation2] sm:$0xff] 0.0
        %245 = vst [vmem:[#allocation2 + $0x18] sm:$0xff] 0.0
        %246 = vst [vmem:[#allocation2 + $0x8] sm:$0xff] %v239
        %247 = vst [vmem:[#allocation2 + $0x10] sm:$0xff] %v240
        %v248 = vld [vmem:[#allocation2] sm:$0xff]
        %v249 = vld [vmem:[#allocation2 + $0x8] sm:$0xff]
        %v250 = vld [vmem:[#allocation2 + $0x10] sm:$0xff]
        %v252 = vlaneseq
        %v253 = vshrl.u32 %v252, 7
        %v254 = vsub.s32 0, %v253
        %v255 = vrot.slane %v241, %v254
        %v256 = vlaneseq
        %v257 = vshrl.u32 %v256, 7
        %v258 = vsub.s32 1, %v257
        %v259 = vrot.slane %v241, %v258
        %260 = vrot.lane.b32.xlu0 %v255, 111
        %v261 = vpop.permute.xlu0 %260
        %262 = vrot.lane.b32.xlu0 %v259, 111
        %v263 = vpop.permute.xlu0 %262
        %vm264 = vcmask 908288
        %v265 = vsel %vm264, %v261, %v263
        %v269 = vmul.f32 %v248, %v261
        %v270 = vmul.f32 %v249, %v265
        %v271 = vmul.f32 %v250, %v263
        %v273 = vlaneseq
        %v274 = vshrl.u32 %v273, 7
        %v275 = vsub.s32 0, %v274
        %v276 = vrot.slane %v243, %v275
        %v277 = vlaneseq
        %v278 = vshrl.u32 %v277, 7
        %v279 = vsub.s32 1, %v278
        %v280 = vrot.slane %v243, %v279
        %281 = vrot.lane.b32.xlu0 %v276, 113
        %v282 = vpop.permute.xlu0 %281
        %283 = vrot.lane.b32.xlu0 %v280, 113
        %v284 = vpop.permute.xlu0 %283
        %vm285 = vcmask 924672
        %v286 = vsel %vm285, %v282, %v284
        %v290 = vmul.f32 %v248, %v282
        %v291 = vmul.f32 %v249, %v286
        %v292 = vmul.f32 %v250, %v284
        %293 = vrot.lane.b32.xlu0 %v255, 127
        %v294 = vpop.permute.xlu0 %293
        %295 = vrot.lane.b32.xlu0 %v259, 127
        %v296 = vpop.permute.xlu0 %295
        %vm297 = vcmask 1039360
        %v298 = vsel %vm297, %v294, %v296
        %v302 = vmul.f32 %v248, %v294
        %v303 = vmul.f32 %v249, %v298
        %v304 = vmul.f32 %v250, %v296
        %v305 = vld [vmem:[#allocation2 + $0x8] sm:$0xff]
        %v306 = vld [vmem:[#allocation2 + $0x10] sm:$0xff]
        %v307 = vld [vmem:[#allocation2 + $0x18] sm:$0xff]
        %308 = vrot.lane.b32.xlu0 %v276, 1
        %v309 = vpop.permute.xlu0 %308
        %310 = vrot.lane.b32.xlu0 %v280, 1
        %v311 = vpop.permute.xlu0 %310
        %vm312 = vcmask 7168
        %v313 = vsel %vm312, %v309, %v311
        %v317 = vmul.f32 %v305, %v309
        %v318 = vmul.f32 %v306, %v313
        %v319 = vmul.f32 %v307, %v311
        %320 = vrot.lane.b32.xlu0 %v255, 15
        %v321 = vpop.permute.xlu0 %320
        %322 = vrot.lane.b32.xlu0 %v259, 15
        %v323 = vpop.permute.xlu0 %322
        %vm324 = vcmask 121856
        %v325 = vsel %vm324, %v321, %v323
        %v329 = vmul.f32 %v305, %v321
        %v330 = vmul.f32 %v306, %v325
        %v331 = vmul.f32 %v307, %v323
        %332 = vrot.lane.b32.xlu0 %v276, 17
        %v333 = vpop.permute.xlu0 %332
        %334 = vrot.lane.b32.xlu0 %v280, 17
        %v335 = vpop.permute.xlu0 %334
        %vm336 = vcmask 138240
        %v337 = vsel %vm336, %v333, %v335
        %v341 = vmul.f32 %v305, %v333
        %v342 = vmul.f32 %v306, %v337
        %v343 = vmul.f32 %v307, %v335
        %347 = vrot.lane.b32.xlu0 %v248, 127
        %v348 = vpop.permute.xlu0 %347
        %349 = vrot.lane.b32.xlu0 %v249, 127
        %v350 = vpop.permute.xlu0 %349
        %351 = vrot.lane.b32.xlu0 %v250, 127
        %v352 = vpop.permute.xlu0 %351
        %v353 = vsel %vm297, %v348, %v350
        %v354 = vsel %vm297, %v350, %v352
        %358 = vrot.lane.b32.xlu0 %v290, 126
        %v359 = vpop.permute.xlu0 %358
        %360 = vrot.lane.b32.xlu0 %v291, 126
        %v361 = vpop.permute.xlu0 %360
        %362 = vrot.lane.b32.xlu0 %v292, 126
        %v363 = vpop.permute.xlu0 %362
        %vm364 = vcmask 1031168
        %v365 = vsel %vm364, %v359, %v361
        %v366 = vsel %vm364, %v361, %v363
        %370 = vrot.lane.b32.xlu0 %v302, 112
        %v371 = vpop.permute.xlu0 %370
        %372 = vrot.lane.b32.xlu0 %v303, 112
        %v373 = vpop.permute.xlu0 %372
        %374 = vrot.lane.b32.xlu0 %v304, 112
        %v375 = vpop.permute.xlu0 %374
        %vm376 = vcmask 916480
        %v377 = vsel %vm376, %v371, %v373
        %v378 = vsel %vm376, %v373, %v375
        %379 = vrot.lane.b32.xlu0 %v249, 111
        %v380 = vpop.permute.xlu0 %379
        %381 = vrot.lane.b32.xlu0 %v250, 111
        %v382 = vpop.permute.xlu0 %381
        %v383 = vsel %vm264, %v380, %v382
        %387 = vrot.lane.b32.xlu0 %v317, 110
        %v388 = vpop.permute.xlu0 %387
        %389 = vrot.lane.b32.xlu0 %v318, 110
        %v390 = vpop.permute.xlu0 %389
        %391 = vrot.lane.b32.xlu0 %v319, 110
        %v392 = vpop.permute.xlu0 %391
        %vm393 = vcmask 900096
        %v394 = vsel %vm393, %v388, %v390
        %v395 = vsel %vm393, %v390, %v392
        %399 = vrot.lane.b32.xlu0 %v329, 96
        %v400 = vpop.permute.xlu0 %399
        %401 = vrot.lane.b32.xlu0 %v330, 96
        %v402 = vpop.permute.xlu0 %401
        %403 = vrot.lane.b32.xlu0 %v331, 96
        %v404 = vpop.permute.xlu0 %403
        %vm405 = vcmask 785408
        %v406 = vsel %vm405, %v400, %v402
        %v407 = vsel %vm405, %v402, %v404
        %411 = vrot.lane.b32.xlu0 %v305, 95
        %v412 = vpop.permute.xlu0 %411
        %413 = vrot.lane.b32.xlu0 %v306, 95
        %v414 = vpop.permute.xlu0 %413
        %415 = vrot.lane.b32.xlu0 %v307, 95
        %v416 = vpop.permute.xlu0 %415
        %vm417 = vcmask 777216
        %v418 = vsel %vm417, %v412, %v414
        %v419 = vsel %vm417, %v414, %v416
        %423 = vrot.lane.b32.xlu0 %v341, 94
        %v424 = vpop.permute.xlu0 %423
        %425 = vrot.lane.b32.xlu0 %v342, 94
        %v426 = vpop.permute.xlu0 %425
        %427 = vrot.lane.b32.xlu0 %v343, 94
        %v428 = vpop.permute.xlu0 %427
        %vm429 = vcmask 769024
        %v430 = vsel %vm429, %v424, %v426
        %v431 = vsel %vm429, %v426, %v428
        %v432 = vld [vmem:[#allocation7] sm:$0xff]
        %436 = vrot.lane.b32.xlu0 %v269, 17
        %v437 = vpop.permute.xlu0 %436
        %438 = vrot.lane.b32.xlu0 %v270, 17
        %v439 = vpop.permute.xlu0 %438
        %440 = vrot.lane.b32.xlu0 %v271, 17
        %v441 = vpop.permute.xlu0 %440
        %442 = vrot.lane.b32.xlu0 %v353, 17
        %v443 = vpop.permute.xlu0 %442
        %444 = vrot.lane.b32.xlu0 %v354, 17
        %v445 = vpop.permute.xlu0 %444
        %446 = vrot.lane.b32.xlu0 %v352, 17
        %v447 = vpop.permute.xlu0 %446
        %448 = vrot.lane.b32.xlu0 %v365, 17
        %v449 = vpop.permute.xlu0 %448
        %450 = vrot.lane.b32.xlu0 %v366, 17
        %v451 = vpop.permute.xlu0 %450
        %452 = vrot.lane.b32.xlu0 %v363, 17
        %v453 = vpop.permute.xlu0 %452
        %454 = vrot.lane.b32.xlu0 %v377, 17
        %v455 = vpop.permute.xlu0 %454
        %456 = vrot.lane.b32.xlu0 %v378, 17
        %v457 = vpop.permute.xlu0 %456
        %458 = vrot.lane.b32.xlu0 %v375, 17
        %v459 = vpop.permute.xlu0 %458
        %460 = vrot.lane.b32.xlu0 %v380, 17
        %v461 = vpop.permute.xlu0 %460
        %462 = vrot.lane.b32.xlu0 %v383, 17
        %v463 = vpop.permute.xlu0 %462
        %464 = vrot.lane.b32.xlu0 %v382, 17
        %v465 = vpop.permute.xlu0 %464
        %466 = vrot.lane.b32.xlu0 %v388, 17
        %v467 = vpop.permute.xlu0 %466
        %468 = vrot.lane.b32.xlu0 %v394, 17
        %v469 = vpop.permute.xlu0 %468
        %470 = vrot.lane.b32.xlu0 %v395, 17
        %v471 = vpop.permute.xlu0 %470
        %472 = vrot.lane.b32.xlu0 %v400, 17
        %v473 = vpop.permute.xlu0 %472
        %474 = vrot.lane.b32.xlu0 %v406, 17
        %v475 = vpop.permute.xlu0 %474
        %476 = vrot.lane.b32.xlu0 %v407, 17
        %v477 = vpop.permute.xlu0 %476
        %478 = vrot.lane.b32.xlu0 %v412, 17
        %v479 = vpop.permute.xlu0 %478
        %480 = vrot.lane.b32.xlu0 %v418, 17
        %v481 = vpop.permute.xlu0 %480
        %482 = vrot.lane.b32.xlu0 %v419, 17
        %v483 = vpop.permute.xlu0 %482
        %484 = vrot.lane.b32.xlu0 %v424, 17
        %v485 = vpop.permute.xlu0 %484
        %486 = vrot.lane.b32.xlu0 %v430, 17
        %v487 = vpop.permute.xlu0 %486
        %488 = vrot.lane.b32.xlu0 %v431, 17
        %v489 = vpop.permute.xlu0 %488
        %v490 = vsel %vm336, %v437, %v439
        %v491 = vsel %vm336, %v439, %v441
        %v492 = vsel %vm336, %v443, %v445
        %v493 = vsel %vm336, %v445, %v447
        %v494 = vsel %vm336, %v449, %v451
        %v495 = vsel %vm336, %v451, %v453
        %v496 = vsel %vm336, %v455, %v457
        %v497 = vsel %vm336, %v457, %v459
        %v498 = vsel %vm336, %v461, %v463
        %v499 = vsel %vm336, %v463, %v465
        %v500 = vsel %vm336, %v467, %v469
        %v501 = vsel %vm336, %v469, %v471
        %v502 = vsel %vm336, %v473, %v475
        %v503 = vsel %vm336, %v475, %v477
        %v504 = vsel %vm336, %v479, %v481
        %v505 = vsel %vm336, %v481, %v483
        %v506 = vsel %vm336, %v485, %v487
        %v507 = vsel %vm336, %v487, %v489
        %vm526 = vcmask 588800
        %v528 = vsel %vm526, %v432, 0
        %530 = vmatprep.subr.mxu0 %v491
        %531 = vmatpush1.msra.mxu0 %v490
        %532 = vmatprep.subr.mxu0 %v493
        %533 = vmatpush1.msra.mxu0 %v492
        %534 = vmatprep.subr.mxu0 %v495
        %535 = vmatpush1.msra.mxu0 %v494
        %536 = vmatprep.subr.mxu0 %v497
        %537 = vmatpush1.msra.mxu0 %v496
        %538 = vmatprep.subr.mxu0 %v499
        %539 = vmatpush1.msra.mxu0 %v498
        %540 = vmatprep.subr.mxu0 %v501
        %541 = vmatpush1.msra.mxu0 %v500
        %542 = vmatprep.subr.mxu0 %v503
        %543 = vmatpush1.msra.mxu0 %v502
        %544 = vmatprep.subr.mxu0 %v505
        %545 = vmatpush1.msra.mxu0 %v504
        %546 = vmatprep.subr.mxu0 %v507
        %547 = vmatpush1.msra.mxu0 %v506
        %548 = vmatprep.subr.mxu0 0.0
        %549 = vmatpush1.msra.mxu0 0.0
        %550 = vmatprep.subr.mxu0 0.0
        %551 = vmatpush1.msra.mxu0 0.0
        %552 = vmatprep.subr.mxu0 0.0
        %553 = vmatpush1.msra.mxu0 0.0
        %554 = vmatprep.subr.mxu0 0.0
        %555 = vmatpush1.msra.mxu0 0.0
        %556 = vmatprep.subr.mxu0 0.0
        %557 = vmatpush1.msra.mxu0 0.0
        %558 = vmatprep.subr.mxu0 0.0
        %559 = vmatpush1.msra.mxu0 0.0
        %560 = vmatprep.subr.mxu0 0.0
        %561 = vmatpush1.msra.mxu0 0.0
        %562 = vmatprep.subr.mxu0 0.0
        %563 = vmatpush1.msra.mxu0 0.0
        %564 = vmatprep.subr.mxu0 0.0
        %565 = vmatpush1.msra.mxu0 0.0
        %566 = vmatprep.subr.mxu0 0.0
        %567 = vmatpush1.msra.mxu0 0.0
        %568 = vmatprep.subr.mxu0 0.0
        %569 = vmatpush1.msra.mxu0 0.0
        %570 = vmatprep.subr.mxu0 0.0
        %571 = vmatpush1.msra.mxu0 0.0
        %572 = vmatprep.subr.mxu0 0.0
        %573 = vmatpush1.msra.mxu0 0.0
        %574 = vmatprep.subr.mxu0 0.0
        %575 = vmatpush1.msra.mxu0 0.0
        %576 = vmatprep.subr.mxu0 0.0
        %577 = vmatpush1.msra.mxu0 0.0
        %578 = vmatprep.subr.mxu0 0.0
        %579 = vmatpush1.msra.mxu0 0.0
        %580 = vmatprep.subr.mxu0 0.0
        %581 = vmatpush1.msra.mxu0 0.0
        %582 = vmatprep.subr.mxu0 0.0
        %583 = vmatpush1.msra.mxu0 0.0
        %584 = vmatprep.subr.mxu0 0.0
        %585 = vmatpush1.msra.mxu0 0.0
        %586 = vmatprep.subr.mxu0 0.0
        %587 = vmatpush1.msra.mxu0 0.0
        %588 = vmatprep.subr.mxu0 0.0
        %589 = vmatpush1.msra.mxu0 0.0
        %590 = vmatprep.subr.mxu0 0.0
        %591 = vmatpush1.msra.mxu0 0.0
        %592 = vmatprep.subr.mxu0 0.0
        %593 = vmatpush1.msra.mxu0 0.0
        %594 = vmatprep.mubr.f32.mxu0 0.0
        %595 = vmatmul.mubr.f32.gmra.mrb[0].mxu0 %v528
        %v596 = vpop.f32.mrb[0].mxu0
        %v597 = vadd.f32 0.0, %v596
        %v598 = vpop.f32.mrb[0].mxu0
        %v599 = vadd.f32 0.0, %v598
        %600 = vdwg.mxu0
        %601 = vst [vmem:[#allocation3] sm:$0xff] 0.0
        %602 = vst [vmem:[#allocation3 + $0x18] sm:$0xff] 0.0
        %603 = vst [vmem:[#allocation3 + $0x8] sm:$0xff] %v597
        %604 = vst [vmem:[#allocation3 + $0x10] sm:$0xff] %v599
        %v605 = vld [vmem:[#allocation3] sm:$0xff]
        %v606 = vld [vmem:[#allocation3 + $0x8] sm:$0xff]
        %v607 = vld [vmem:[#allocation3 + $0x10] sm:$0xff]
        %v608 = vmul.f32 %v605, %v261
        %v609 = vmul.f32 %v606, %v265
        %v610 = vmul.f32 %v607, %v263
        %v611 = vmul.f32 %v605, %v282
        %v612 = vmul.f32 %v606, %v286
        %v613 = vmul.f32 %v607, %v284
        %v614 = vmul.f32 %v605, %v294
        %v615 = vmul.f32 %v606, %v298
        %v616 = vmul.f32 %v607, %v296
        %v617 = vld [vmem:[#allocation3 + $0x8] sm:$0xff]
        %v618 = vld [vmem:[#allocation3 + $0x10] sm:$0xff]
        %v619 = vld [vmem:[#allocation3 + $0x18] sm:$0xff]
        %v620 = vmul.f32 %v617, %v309
        %v621 = vmul.f32 %v618, %v313
        %v622 = vmul.f32 %v619, %v311
        %v623 = vmul.f32 %v617, %v321
        %v624 = vmul.f32 %v618, %v325
        %v625 = vmul.f32 %v619, %v323
        %v626 = vmul.f32 %v617, %v333
        %v627 = vmul.f32 %v618, %v337
        %v628 = vmul.f32 %v619, %v335
        %632 = vrot.lane.b32.xlu0 %v605, 127
        %v633 = vpop.permute.xlu0 %632
        %634 = vrot.lane.b32.xlu0 %v606, 127
        %v635 = vpop.permute.xlu0 %634
        %636 = vrot.lane.b32.xlu0 %v607, 127
        %v637 = vpop.permute.xlu0 %636
        %v638 = vsel %vm297, %v633, %v635
        %v639 = vsel %vm297, %v635, %v637
        %643 = vrot.lane.b32.xlu0 %v611, 126
        %v644 = vpop.permute.xlu0 %643
        %645 = vrot.lane.b32.xlu0 %v612, 126
        %v646 = vpop.permute.xlu0 %645
        %647 = vrot.lane.b32.xlu0 %v613, 126
        %v648 = vpop.permute.xlu0 %647
        %v649 = vsel %vm364, %v644, %v646
        %v650 = vsel %vm364, %v646, %v648
        %654 = vrot.lane.b32.xlu0 %v614, 112
        %v655 = vpop.permute.xlu0 %654
        %656 = vrot.lane.b32.xlu0 %v615, 112
        %v657 = vpop.permute.xlu0 %656
        %658 = vrot.lane.b32.xlu0 %v616, 112
        %v659 = vpop.permute.xlu0 %658
        %v660 = vsel %vm376, %v655, %v657
        %v661 = vsel %vm376, %v657, %v659
        %662 = vrot.lane.b32.xlu0 %v606, 111
        %v663 = vpop.permute.xlu0 %662
        %664 = vrot.lane.b32.xlu0 %v607, 111
        %v665 = vpop.permute.xlu0 %664
        %v666 = vsel %vm264, %v663, %v665
        %670 = vrot.lane.b32.xlu0 %v620, 110
        %v671 = vpop.permute.xlu0 %670
        %672 = vrot.lane.b32.xlu0 %v621, 110
        %v673 = vpop.permute.xlu0 %672
        %674 = vrot.lane.b32.xlu0 %v622, 110
        %v675 = vpop.permute.xlu0 %674
        %v676 = vsel %vm393, %v671, %v673
        %v677 = vsel %vm393, %v673, %v675
        %681 = vrot.lane.b32.xlu0 %v623, 96
        %v682 = vpop.permute.xlu0 %681
        %683 = vrot.lane.b32.xlu0 %v624, 96
        %v684 = vpop.permute.xlu0 %683
        %685 = vrot.lane.b32.xlu0 %v625, 96
        %v686 = vpop.permute.xlu0 %685
        %v687 = vsel %vm405, %v682, %v684
        %v688 = vsel %vm405, %v684, %v686
        %692 = vrot.lane.b32.xlu0 %v617, 95
        %v693 = vpop.permute.xlu0 %692
        %694 = vrot.lane.b32.xlu0 %v618, 95
        %v695 = vpop.permute.xlu0 %694
        %696 = vrot.lane.b32.xlu0 %v619, 95
        %v697 = vpop.permute.xlu0 %696
        %v698 = vsel %vm417, %v693, %v695
        %v699 = vsel %vm417, %v695, %v697
        %703 = vrot.lane.b32.xlu0 %v626, 94
        %v704 = vpop.permute.xlu0 %703
        %705 = vrot.lane.b32.xlu0 %v627, 94
        %v706 = vpop.permute.xlu0 %705
        %707 = vrot.lane.b32.xlu0 %v628, 94
        %v708 = vpop.permute.xlu0 %707
        %v709 = vsel %vm429, %v704, %v706
        %v710 = vsel %vm429, %v706, %v708
        %v711 = vld [vmem:[#allocation9] sm:$0xff]
        %715 = vrot.lane.b32.xlu0 %v608, 17
        %v716 = vpop.permute.xlu0 %715
        %717 = vrot.lane.b32.xlu0 %v609, 17
        %v718 = vpop.permute.xlu0 %717
        %719 = vrot.lane.b32.xlu0 %v610, 17
        %v720 = vpop.permute.xlu0 %719
        %721 = vrot.lane.b32.xlu0 %v638, 17
        %v722 = vpop.permute.xlu0 %721
        %723 = vrot.lane.b32.xlu0 %v639, 17
        %v724 = vpop.permute.xlu0 %723
        %725 = vrot.lane.b32.xlu0 %v637, 17
        %v726 = vpop.permute.xlu0 %725
        %727 = vrot.lane.b32.xlu0 %v649, 17
        %v728 = vpop.permute.xlu0 %727
        %729 = vrot.lane.b32.xlu0 %v650, 17
        %v730 = vpop.permute.xlu0 %729
        %731 = vrot.lane.b32.xlu0 %v648, 17
        %v732 = vpop.permute.xlu0 %731
        %733 = vrot.lane.b32.xlu0 %v660, 17
        %v734 = vpop.permute.xlu0 %733
        %735 = vrot.lane.b32.xlu0 %v661, 17
        %v736 = vpop.permute.xlu0 %735
        %737 = vrot.lane.b32.xlu0 %v659, 17
        %v738 = vpop.permute.xlu0 %737
        %739 = vrot.lane.b32.xlu0 %v663, 17
        %v740 = vpop.permute.xlu0 %739
        %741 = vrot.lane.b32.xlu0 %v666, 17
        %v742 = vpop.permute.xlu0 %741
        %743 = vrot.lane.b32.xlu0 %v665, 17
        %v744 = vpop.permute.xlu0 %743
        %745 = vrot.lane.b32.xlu0 %v671, 17
        %v746 = vpop.permute.xlu0 %745
        %747 = vrot.lane.b32.xlu0 %v676, 17
        %v748 = vpop.permute.xlu0 %747
        %749 = vrot.lane.b32.xlu0 %v677, 17
        %v750 = vpop.permute.xlu0 %749
        %751 = vrot.lane.b32.xlu0 %v682, 17
        %v752 = vpop.permute.xlu0 %751
        %753 = vrot.lane.b32.xlu0 %v687, 17
        %v754 = vpop.permute.xlu0 %753
        %755 = vrot.lane.b32.xlu0 %v688, 17
        %v756 = vpop.permute.xlu0 %755
        %757 = vrot.lane.b32.xlu0 %v693, 17
        %v758 = vpop.permute.xlu0 %757
        %759 = vrot.lane.b32.xlu0 %v698, 17
        %v760 = vpop.permute.xlu0 %759
        %761 = vrot.lane.b32.xlu0 %v699, 17
        %v762 = vpop.permute.xlu0 %761
        %763 = vrot.lane.b32.xlu0 %v704, 17
        %v764 = vpop.permute.xlu0 %763
        %765 = vrot.lane.b32.xlu0 %v709, 17
        %v766 = vpop.permute.xlu0 %765
        %767 = vrot.lane.b32.xlu0 %v710, 17
        %v768 = vpop.permute.xlu0 %767
        %v769 = vsel %vm336, %v716, %v718
        %v770 = vsel %vm336, %v718, %v720
        %v771 = vsel %vm336, %v722, %v724
        %v772 = vsel %vm336, %v724, %v726
        %v773 = vsel %vm336, %v728, %v730
        %v774 = vsel %vm336, %v730, %v732
        %v775 = vsel %vm336, %v734, %v736
        %v776 = vsel %vm336, %v736, %v738
        %v777 = vsel %vm336, %v740, %v742
        %v778 = vsel %vm336, %v742, %v744
        %v779 = vsel %vm336, %v746, %v748
        %v780 = vsel %vm336, %v748, %v750
        %v781 = vsel %vm336, %v752, %v754
        %v782 = vsel %vm336, %v754, %v756
        %v783 = vsel %vm336, %v758, %v760
        %v784 = vsel %vm336, %v760, %v762
        %v785 = vsel %vm336, %v764, %v766
        %v786 = vsel %vm336, %v766, %v768
        %v806 = vsel %vm526, %v711, 0
        %808 = vmatprep.subr.mxu0 %v770
        %809 = vmatpush1.msra.mxu0 %v769
        %810 = vmatprep.subr.mxu0 %v772
        %811 = vmatpush1.msra.mxu0 %v771
        %812 = vmatprep.subr.mxu0 %v774
        %813 = vmatpush1.msra.mxu0 %v773
        %814 = vmatprep.subr.mxu0 %v776
        %815 = vmatpush1.msra.mxu0 %v775
        %816 = vmatprep.subr.mxu0 %v778
        %817 = vmatpush1.msra.mxu0 %v777
        %818 = vmatprep.subr.mxu0 %v780
        %819 = vmatpush1.msra.mxu0 %v779
        %820 = vmatprep.subr.mxu0 %v782
        %821 = vmatpush1.msra.mxu0 %v781
        %822 = vmatprep.subr.mxu0 %v784
        %823 = vmatpush1.msra.mxu0 %v783
        %824 = vmatprep.subr.mxu0 %v786
        %825 = vmatpush1.msra.mxu0 %v785
        %826 = vmatprep.subr.mxu0 0.0
        %827 = vmatpush1.msra.mxu0 0.0
        %828 = vmatprep.subr.mxu0 0.0
        %829 = vmatpush1.msra.mxu0 0.0
        %830 = vmatprep.subr.mxu0 0.0
        %831 = vmatpush1.msra.mxu0 0.0
        %832 = vmatprep.subr.mxu0 0.0
        %833 = vmatpush1.msra.mxu0 0.0
        %834 = vmatprep.subr.mxu0 0.0
        %835 = vmatpush1.msra.mxu0 0.0
        %836 = vmatprep.subr.mxu0 0.0
        %837 = vmatpush1.msra.mxu0 0.0
        %838 = vmatprep.subr.mxu0 0.0
        %839 = vmatpush1.msra.mxu0 0.0
        %840 = vmatprep.subr.mxu0 0.0
        %841 = vmatpush1.msra.mxu0 0.0
        %842 = vmatprep.subr.mxu0 0.0
        %843 = vmatpush1.msra.mxu0 0.0
        %844 = vmatprep.subr.mxu0 0.0
        %845 = vmatpush1.msra.mxu0 0.0
        %846 = vmatprep.subr.mxu0 0.0
        %847 = vmatpush1.msra.mxu0 0.0
        %848 = vmatprep.subr.mxu0 0.0
        %849 = vmatpush1.msra.mxu0 0.0
        %850 = vmatprep.subr.mxu0 0.0
        %851 = vmatpush1.msra.mxu0 0.0
        %852 = vmatprep.subr.mxu0 0.0
        %853 = vmatpush1.msra.mxu0 0.0
        %854 = vmatprep.subr.mxu0 0.0
        %855 = vmatpush1.msra.mxu0 0.0
        %856 = vmatprep.subr.mxu0 0.0
        %857 = vmatpush1.msra.mxu0 0.0
        %858 = vmatprep.subr.mxu0 0.0
        %859 = vmatpush1.msra.mxu0 0.0
        %860 = vmatprep.subr.mxu0 0.0
        %861 = vmatpush1.msra.mxu0 0.0
        %862 = vmatprep.subr.mxu0 0.0
        %863 = vmatpush1.msra.mxu0 0.0
        %864 = vmatprep.subr.mxu0 0.0
        %865 = vmatpush1.msra.mxu0 0.0
        %866 = vmatprep.subr.mxu0 0.0
        %867 = vmatpush1.msra.mxu0 0.0
        %868 = vmatprep.subr.mxu0 0.0
        %869 = vmatpush1.msra.mxu0 0.0
        %870 = vmatprep.subr.mxu0 0.0
        %871 = vmatpush1.msra.mxu0 0.0
        %872 = vmatprep.mubr.f32.mxu0 0.0
        %873 = vmatmul.mubr.f32.gmra.mrb[0].mxu0 %v806
        %v874 = vpop.f32.mrb[0].mxu0
        %v875 = vadd.f32 0.0, %v874
        %v876 = vpop.f32.mrb[0].mxu0
        %v877 = vadd.f32 0.0, %v876
        %878 = vdwg.mxu0
        %v879 = vmax.f32 %v875, 0.0
        %v880 = vmax.f32 %v877, 0.0
        %v881 = vadd.f32 %v879, %v239
        %v882 = vadd.f32 %v880, %v240
        %883 = vst [vmem:[%s238] sm:$0xff] %v881
        %884 = vst [vmem:[%s238 + $0x8] sm:$0xff] %v882
        %s885 = sand.u32 %s119, 1
        %s886 = scalar_lea.sflag [#allocation6], %s885
        %s887 = sand.u32 %s119, 1
        %s888 = smul.addr %s887, 16
        %s889 = scalar_lea.vmem [#allocation10], %s888
        // Predicated region
        $region49: #{tpu_custom_call.1} parent=35 // pred_check
          %p890 = pneg %p129
        $region50: #{tpu_custom_call.1} parent=35 // pred_check_branch
          %892 = sbr.rel (%p890) target = $region52
        $region51: #{tpu_custom_call.1} parent=35 // pred_region
          %s894 = ssub.s32 256, 256
          %895 = vsyncadd %s886, %s894
          %s896 = smul.addr %s22, 2
          %s897 = smul.addr %s896, 128
          %s898 = scalar_lea.hbm %s4, %s897
          %s900 = sshll.u32 %s889, 4
          %s901 = int_to_ptr.vmem [resolvable:$true] %s900
          %903 = dma.vmem_to_hbm [thread:$0]  %s901, 256, %s898, %s886
        $region52: #{tpu_custom_call.1} parent=35 // pred_fallthru
          _
      $region36: #{tpu_custom_call.1} parent=5 // pred_fallthru
        _
      %p904 = scmp.le.s32.totalorder 2, %s17
      // Predicated region
      $region53: #{tpu_custom_call.1} parent=5 // pred_check
        %p905 = pneg %p904
      $region54: #{tpu_custom_call.1} parent=5 // pred_check_branch
        %907 = sbr.rel (%p905) target = $region56
      $region55: #{tpu_custom_call.1} parent=5 // pred_region
        %s908 = ssub.s32 %s17, 2
        // Predicated region
        $region57: #{tpu_custom_call.1} parent=55 // pred_check
          %p909 = pneg %p135
        $region58: #{tpu_custom_call.1} parent=55 // pred_check_branch
          %911 = sbr.rel (%p909) target = $region60
        $region59: #{tpu_custom_call.1} parent=55 // pred_region
          %s912 = sand.u32 %s120, 1
          %s913 = scalar_lea.sflag [#allocation6], %s912
          %s914 = sand.u32 %s120, 1
          %s915 = smul.addr %s914, 16
          %s916 = scalar_lea.vmem [#allocation10], %s915
          %917 = dma.done %s913, 256
        $region60: #{tpu_custom_call.1} parent=55 // pred_fallthru
          _
      $region56: #{tpu_custom_call.1} parent=5 // pred_fallthru
        _
    $region6: #{tpu_custom_call.1} parent=1 // loop_footer
      %s21 = sadd.s32 1, %s17
    $region7: #{tpu_custom_call.1} parent=1 // loop_footer_branch
      %16 = sbr.rel target = $region3
    $region8: #{tpu_custom_call.1} parent=1 // loop_exit
      _
    %918 = vsyncpa [#allocation5], 1
    %s919 = scalar_lea.sflag [#allocation5], 1
    %920 = vsyncpa %s919, 1
    %921 = vsyncpa [#allocation8], 1
    %922 = vsyncpa [#allocation6], 1
    %s923 = scalar_lea.sflag [#allocation6], 1
    %924 = vsyncpa %s923, 1

</llo_original>
